<compile_context>
chip_gen: v5e
topology: v5e:2x2
jax: 0.10.0
libtpu: 0.0.40
codegen_flags: <defaults>
</compile_context>

<pallas_src>
import collections

import jax
import jax.numpy as jnp
from jax.experimental import pallas as pl
from jax.experimental.pallas import tpu as pltpu


def _round_up(x, m):
    return (x + m - 1) // m * m


# ---------------------------------------------------------------------------
# Kernel: one (tm, tn) output tile of  y = softsign(x @ w + b)
# ---------------------------------------------------------------------------
def _linear_softsign_kernel(x_ref, w_ref, b_ref, o_ref, acc_ref):
    """x_ref (tm,tk) bf16, w_ref (tk,tn) bf16, b_ref (1,tn) f32.

    Accumulates f32 in a VMEM scratch across the k axis; the bias + softsign
    epilogue (f32 on the VPU) and the single cast/store to o_ref happen only
    on the last k step.

    NOTE (correctness): this relies on the reduction (k) axis being the LAST
    grid dimension and marked "arbitrary" so the (i, j) output block stays
    resident across all k steps. Do not reorder the grid or its semantics.
    Zero padding is only valid because softsign(0 + 0) = 0; keep the epilogue
    zero-preserving.
    """
    k = pl.program_id(2)

    @pl.when(k == 0)
    def _():
        acc_ref[...] = jnp.zeros_like(acc_ref)

    acc_ref[...] += jnp.dot(
        x_ref[...], w_ref[...], preferred_element_type=jnp.float32
    )

    @pl.when(k == pl.num_programs(2) - 1)
    def _():
        z = acc_ref[...] + b_ref[...]                               # bias
        o_ref[...] = (z / (1.0 + jnp.abs(z))).astype(o_ref.dtype)   # softsign


def _linear_softsign_padded(x_p, w_p, b_p, *, tm, tn, tk, out_dtype):
    """Fused softsign(x @ w + b) on pre-padded operands.

    x_p: (Mp, Kp) bf16, w_p: (Kp, Np) bf16, b_p: (1, Np) f32, with
    Mp % tm == Kp % tk == Np % tn == 0. Returns (Mp, Np) out_dtype.
    """
    Mp, Kp = x_p.shape
    Kp2, Np = w_p.shape
    assert Kp == Kp2 and b_p.shape == (1, Np)
    assert Mp % tm == 0 and Kp % tk == 0 and Np % tn == 0

    grid = (Mp // tm, Np // tn, Kp // tk)
    out_itemsize = jnp.dtype(out_dtype).itemsize

    # Pipelined VMEM: double-buffered bf16 x/w tiles + f32 bias + resident f32
    # accumulator + double-buffered output tile + headroom. The tile heuristic
    # keeps this <= ~32 MiB, well under v7x's 64 MiB physical VMEM.
    vmem_bytes = (
        2 * (tm * tk * 2 + tk * tn * 2 + tn * 4)
        + tm * tn * 4
        + 2 * tm * tn * out_itemsize
        + (8 << 20)
    )
    vmem_bytes = int(max(vmem_bytes, 32 << 20))

    # TODO(synk): if weight DMA is still exposed on v7x after tile enlargement,
    # add pipeline_mode=pl.Buffered(3) on the weight BlockSpec.
    return pl.pallas_call(
        _linear_softsign_kernel,
        out_shape=jax.ShapeDtypeStruct((Mp, Np), out_dtype),
        grid_spec=pltpu.PrefetchScalarGridSpec(
            num_scalar_prefetch=0,
            grid=grid,
            in_specs=[
                pl.BlockSpec((tm, tk), lambda i, j, k: (i, k)),
                pl.BlockSpec((tk, tn), lambda i, j, k: (k, j)),
                pl.BlockSpec((1, tn), lambda i, j, k: (0, j)),
            ],
            out_specs=pl.BlockSpec((tm, tn), lambda i, j, k: (i, j)),
            scratch_shapes=[pltpu.VMEM((tm, tn), jnp.float32)],
        ),
        compiler_params=pltpu.CompilerParams(
            dimension_semantics=("parallel", "parallel", "arbitrary"),
            vmem_limit_bytes=vmem_bytes,
        ),
    )(x_p, w_p, b_p)


# ---------------------------------------------------------------------------
# Tile / padding configuration (static, computed once)
# ---------------------------------------------------------------------------
def _dim_tiles(d):
    """Tiles for a feature dim used as N in one layer and K in the other.

    Returns (n_tile, k_tile, padded_dim). Large dims get lane-dense 1024-wide
    N tiles and 2048-deep K tiles only when that costs no extra padding
    (69366 -> 69632 with tk=2048; 15000 -> 15360 with tk=1024). Small dims use
    one full-extent tile rounded up to 128 lanes.
    """
    if d <= 2048:
        t = _round_up(d, 128)
        return t, t, t
    dp1024 = _round_up(d, 1024)
    dp2048 = _round_up(d, 2048)
    if dp2048 == dp1024:
        return 1024, 2048, dp2048
    return 1024, 1024, dp1024


AutoencoderConfig = collections.namedtuple(
    "AutoencoderConfig",
    ["d_in", "d_hid", "d_in_p", "d_hid_p",
     "tk_enc", "tn_enc", "tk_dec", "tn_dec"],
)


def make_config(d_in, d_hid):
    tn_in, tk_in, d_in_p = _dim_tiles(d_in)        # d_in: K of enc, N of dec
    tn_hid, tk_hid, d_hid_p = _dim_tiles(d_hid)    # d_hid: N of enc, K of dec
    return AutoencoderConfig(
        d_in=d_in, d_hid=d_hid, d_in_p=d_in_p, d_hid_p=d_hid_p,
        tk_enc=tk_in, tn_enc=tn_hid, tk_dec=tk_hid, tn_dec=tn_in,
    )


def _prepare_layer(w_torch, b, k_pad, n_pad):
    """One-time prep OUTSIDE jit: torch (out, in) f32 weight -> (k_pad, n_pad)
    bf16, bias -> (1, n_pad) f32. Zero padding is exact (contributes 0 to the
    dot, and softsign(0 + 0) = 0 keeps padded output columns valid K-padding
    for the next layer)."""
    n, k = w_torch.shape
    w = jnp.asarray(w_torch, jnp.float32).T.astype(jnp.bfloat16)
    w = jnp.pad(w, ((0, k_pad - k), (0, n_pad - n)))
    b_p = jnp.pad(jnp.asarray(b, jnp.float32), (0, n_pad - n)).reshape(1, n_pad)
    return w, b_p


def make_autoencoder(d_in, d_hid):
    """Returns (prepare_params, forward) for the 2-layer softsign autoencoder."""
    cfg = make_config(d_in, d_hid)

    def prepare_params(enc_w, enc_b, dec_w, dec_b):
        # enc_w: (d_hid, d_in) torch layout; dec_w: (d_in, d_hid).
        # TODO(synk): optional int8 (v5e/v6e) / fp8 (v7x) weight quantization
        # with per-column scales applied in the f32 epilogue would halve weight
        # streaming again (needs an accuracy check).
        enc_w_p, enc_b_p = _prepare_layer(enc_w, enc_b, cfg.d_in_p, cfg.d_hid_p)
        dec_w_p, dec_b_p = _prepare_layer(dec_w, dec_b, cfg.d_hid_p, cfg.d_in_p)
        return enc_w_p, enc_b_p, dec_w_p, dec_b_p

    @jax.jit
    def forward(x, params):
        enc_w_p, enc_b_p, dec_w_p, dec_b_p = params
        m, k = x.shape
        assert k == cfg.d_in, (k, cfg.d_in)
        # Batch tile: >=16 for bf16 sublane packing; up to 512 so large batches
        # get enough arithmetic intensity per streamed weight byte.
        tm = 512 if m >= 512 else _round_up(m, 16)
        m_p = _round_up(m, tm)
        x_p = x.astype(jnp.bfloat16)
        if (m_p, cfg.d_in_p) != (m, k):
            x_p = jnp.pad(x_p, ((0, m_p - m), (0, cfg.d_in_p - k)))

        # Encoder: bf16 hidden, kept in its padded layout (padded columns are
        # softsign(0 + 0) = 0, i.e. valid zero K-padding for the decoder).
        h_p = _linear_softsign_padded(
            x_p, enc_w_p, enc_b_p,
            tm=tm, tn=cfg.tn_enc, tk=cfg.tk_enc, out_dtype=jnp.bfloat16)
        # Decoder: final output in f32 to match the PyTorch module.
        y_p = _linear_softsign_padded(
            h_p, dec_w_p, dec_b_p,
            tm=tm, tn=cfg.tn_dec, tk=cfg.tk_dec, out_dtype=jnp.float32)
        return y_p[:m, :cfg.d_in]

    return prepare_params, forward


# ---------------------------------------------------------------------------
# Reference & test harness
# ---------------------------------------------------------------------------
def init_linear_params(key, in_features, out_features):
    """Deterministic PyTorch-style init: U(-1/sqrt(in), 1/sqrt(in)); weight in
    torch (out, in) layout."""
    kw, kb = jax.random.split(key)
    bound = 1.0 / jnp.sqrt(jnp.float32(in_features))
    w = jax.random.uniform(
        kw, (out_features, in_features), jnp.float32, -bound, bound
    )
    b = jax.random.uniform(kb, (out_features,), jnp.float32, -bound, bound)
    return w, b


def reference_forward(x, enc_w, enc_b, dec_w, dec_b):
    """Pure-JAX reference emulating the kernel's bf16-in / f32-accum matmuls.
    (Expect ~1e-2 relative drift vs a true-f32 PyTorch forward from the bf16
    casts; outputs are softsign-bounded in (-1, 1) so this is benign.)"""
    def softsign(z):
        return z / (1.0 + jnp.abs(z))

    def lin(a, w, b):
        z = jnp.dot(a.astype(jnp.bfloat16), w.T.astype(jnp.bfloat16),
                    preferred_element_type=jnp.float32) + b
        return softsign(z)

    h = lin(x, enc_w, enc_b)
    return lin(h, dec_w, dec_b)


if __name__ == "__main__":
    # Small shapes consistent with the module (original: [69366, 15000]).
    # Deliberately NOT multiples of 8/128 so the padding path is exercised
    # (the real dims 69366 / 15000 are not multiples either).
    BATCH, D_IN, D_HID = 6, 200, 96

    key = jax.random.PRNGKey(0)
    kx, kenc, kdec = jax.random.split(key, 3)
    x = jax.random.normal(kx, (BATCH, D_IN), jnp.float32)
    enc_w, enc_b = init_linear_params(kenc, D_IN, D_HID)   # torch (out, in)
    dec_w, dec_b = init_linear_params(kdec, D_HID, D_IN)

    prepare_params, forward = make_autoencoder(D_IN, D_HID)
    # One-time weight prep (transpose + bf16 + pad) OUTSIDE the jitted forward.
    params = jax.block_until_ready(prepare_params(enc_w, enc_b, dec_w, dec_b))

    out = jax.block_until_ready(forward(x, params))
    ref = reference_forward(x, enc_w, enc_b, dec_w, dec_b)

    assert out.shape == (BATCH, D_IN), out.shape
    max_err = float(jnp.max(jnp.abs(out - ref)))
    assert jnp.allclose(out, ref, atol=5e-3, rtol=5e-3), max_err
    print("KERNEL_OK")
</pallas_src>

<mosaic_0001>
module attributes {stable_mosaic.version = 11 : i64} {
  func.func @_linear_softsign_kernel(%arg0: i32, %arg1: i32, %arg2: i32, %arg3: memref<16x256xbf16, #tpu.memory_space<vmem>>, %arg4: memref<256x128xbf16, #tpu.memory_space<vmem>>, %arg5: memref<1x128xf32, #tpu.memory_space<vmem>>, %arg6: memref<16x128xbf16, #tpu.memory_space<vmem>>, %arg7: memref<16x128xf32, #tpu.memory_space<vmem>>) attributes {dimension_semantics = [#tpu.dimension_semantics<parallel>, #tpu.dimension_semantics<parallel>, #tpu.dimension_semantics<arbitrary>], iteration_bounds = array<i64: 1, 1, 1>, scalar_prefetch = 0 : i64, scratch_operands = 1 : i64, tpu.core_type = #tpu.core_type<tc>, window_params = [{transform_indices = @transform_0, window_bounds = array<i64: 16, 256>}, {transform_indices = @transform_1, window_bounds = array<i64: 256, 128>}, {transform_indices = @transform_2, window_bounds = array<i64: 1, 128>}, {transform_indices = @transform_3, window_bounds = array<i64: 16, 128>}]} {
    %c0_i32 = arith.constant 0 : i32
    %0 = arith.cmpi eq, %arg2, %c0_i32 : i32
    %1 = arith.extui %0 : i1 to i32
    %c0_i32_0 = arith.constant 0 : i32
    %2 = arith.cmpi ne, %1, %c0_i32_0 : i32
    scf.if %2 {
      %cst_10 = arith.constant 0.000000e+00 : f32
      %12 = vector.broadcast %cst_10 : f32 to vector<16x128xf32>
      %c0_11 = arith.constant 0 : index
      %c0_12 = arith.constant 0 : index
      %13 = vector.load %arg7[%c0_11, %c0_12] : memref<16x128xf32, #tpu.memory_space<vmem>>, vector<16x128xf32>
      tpu.vector_store %arg7[%c0_11, %c0_12], %12 {strides = array<i32>} : memref<16x128xf32, #tpu.memory_space<vmem>>, vector<16x128xf32>,
    } else {
    }
    %c0 = arith.constant 0 : index
    %c0_1 = arith.constant 0 : index
    %3 = vector.load %arg7[%c0, %c0_1] : memref<16x128xf32, #tpu.memory_space<vmem>>, vector<16x128xf32>
    %c0_2 = arith.constant 0 : index
    %c0_3 = arith.constant 0 : index
    %4 = vector.load %arg3[%c0_2, %c0_3] : memref<16x256xbf16, #tpu.memory_space<vmem>>, vector<16x256xbf16>
    %c0_4 = arith.constant 0 : index
    %c0_5 = arith.constant 0 : index
    %5 = vector.load %arg4[%c0_4, %c0_5] : memref<256x128xbf16, #tpu.memory_space<vmem>>, vector<256x128xbf16>
    %cst = arith.constant dense<0.000000e+00> : vector<16x128xf32>
    %6 = tpu.matmul %4, %5, %cst {dimension_numbers = #tpu.dot_dimension_numbers<[1], [0], [0], [1], [0, 0, 1, 1], [], []>} : vector<16x256xbf16>, vector<256x128xbf16>, vector<16x128xf32> -> vector<16x128xf32>
    %7 = arith.addf %3, %6 : vector<16x128xf32>
    %c0_6 = arith.constant 0 : index
    %c0_7 = arith.constant 0 : index
    %8 = vector.load %arg7[%c0_6, %c0_7] : memref<16x128xf32, #tpu.memory_space<vmem>>, vector<16x128xf32>
    tpu.vector_store %arg7[%c0_6, %c0_7], %7 {strides = array<i32>} : memref<16x128xf32, #tpu.memory_space<vmem>>, vector<16x128xf32>,
    %c0_i32_8 = arith.constant 0 : i32
    %9 = arith.cmpi eq, %arg2, %c0_i32_8 : i32
    %10 = arith.extui %9 : i1 to i32
    %c0_i32_9 = arith.constant 0 : i32
    %11 = arith.cmpi ne, %10, %c0_i32_9 : i32
    scf.if %11 {
      %c0_10 = arith.constant 0 : index
      %c0_11 = arith.constant 0 : index
      %12 = vector.load %arg7[%c0_10, %c0_11] : memref<16x128xf32, #tpu.memory_space<vmem>>, vector<16x128xf32>
      %c0_12 = arith.constant 0 : index
      %c0_13 = arith.constant 0 : index
      %13 = vector.load %arg5[%c0_12, %c0_13] : memref<1x128xf32, #tpu.memory_space<vmem>>, vector<1x128xf32>
      %14 = vector.broadcast %13 : vector<1x128xf32> to vector<16x128xf32>
      %15 = arith.addf %12, %14 : vector<16x128xf32>
      %16 = math.absf %15 : vector<16x128xf32>
      %cst_14 = arith.constant 1.000000e+00 : f32
      %17 = vector.broadcast %cst_14 : f32 to vector<16x128xf32>
      %18 = arith.addf %17, %16 : vector<16x128xf32>
      %19 = arith.divf %15, %18 : vector<16x128xf32>
      %20 = arith.truncf %19 : vector<16x128xf32> to vector<16x128xbf16>
      %c0_15 = arith.constant 0 : index
      %c0_16 = arith.constant 0 : index
      %21 = vector.load %arg6[%c0_15, %c0_16] : memref<16x128xbf16, #tpu.memory_space<vmem>>, vector<16x128xbf16>
      tpu.vector_store %arg6[%c0_15, %c0_16], %20 {strides = array<i32>} : memref<16x128xbf16, #tpu.memory_space<vmem>>, vector<16x128xbf16>,
    } else {
    }
    return
  }
  func.func @transform_0(%arg0: i32, %arg1: i32, %arg2: i32) -> (i32, i32) {
    %c0_i32 = arith.constant 0 : i32
    return %arg0, %arg2 : i32, i32
  }
  func.func @transform_1(%arg0: i32, %arg1: i32, %arg2: i32) -> (i32, i32) {
    %c0_i32 = arith.constant 0 : i32
    return %arg2, %arg1 : i32, i32
  }
  func.func @transform_2(%arg0: i32, %arg1: i32, %arg2: i32) -> (i32, i32) {
    %c0_i32 = arith.constant 0 : i32
    %c0_i32_0 = arith.constant 0 : i32
    return %c0_i32, %arg1 : i32, i32
  }
  func.func @transform_3(%arg0: i32, %arg1: i32, %arg2: i32) -> (i32, i32) {
    %c0_i32 = arith.constant 0 : i32
    return %arg0, %arg1 : i32, i32
  }
}

module attributes {stable_mosaic.version = 11 : i64} {
  func.func @_linear_softsign_kernel(%arg0: i32, %arg1: i32, %arg2: i32, %arg3: memref<16x128xbf16, #tpu.memory_space<vmem>>, %arg4: memref<128x256xbf16, #tpu.memory_space<vmem>>, %arg5: memref<1x256xf32, #tpu.memory_space<vmem>>, %arg6: memref<16x256xf32, #tpu.memory_space<vmem>>, %arg7: memref<16x256xf32, #tpu.memory_space<vmem>>) attributes {dimension_semantics = [#tpu.dimension_semantics<parallel>, #tpu.dimension_semantics<parallel>, #tpu.dimension_semantics<arbitrary>], iteration_bounds = array<i64: 1, 1, 1>, scalar_prefetch = 0 : i64, scratch_operands = 1 : i64, tpu.core_type = #tpu.core_type<tc>, window_params = [{transform_indices = @transform_0, window_bounds = array<i64: 16, 128>}, {transform_indices = @transform_1, window_bounds = array<i64: 128, 256>}, {transform_indices = @transform_2, window_bounds = array<i64: 1, 256>}, {transform_indices = @transform_3, window_bounds = array<i64: 16, 256>}]} {
    %c0_i32 = arith.constant 0 : i32
    %0 = arith.cmpi eq, %arg2, %c0_i32 : i32
    %1 = arith.extui %0 : i1 to i32
    %c0_i32_0 = arith.constant 0 : i32
    %2 = arith.cmpi ne, %1, %c0_i32_0 : i32
    scf.if %2 {
      %cst_10 = arith.constant 0.000000e+00 : f32
      %12 = vector.broadcast %cst_10 : f32 to vector<16x256xf32>
      %c0_11 = arith.constant 0 : index
      %c0_12 = arith.constant 0 : index
      %13 = vector.load %arg7[%c0_11, %c0_12] : memref<16x256xf32, #tpu.memory_space<vmem>>, vector<16x256xf32>
      tpu.vector_store %arg7[%c0_11, %c0_12], %12 {strides = array<i32>} : memref<16x256xf32, #tpu.memory_space<vmem>>, vector<16x256xf32>,
    } else {
    }
    %c0 = arith.constant 0 : index
    %c0_1 = arith.constant 0 : index
    %3 = vector.load %arg7[%c0, %c0_1] : memref<16x256xf32, #tpu.memory_space<vmem>>, vector<16x256xf32>
    %c0_2 = arith.constant 0 : index
    %c0_3 = arith.constant 0 : index
    %4 = vector.load %arg3[%c0_2, %c0_3] : memref<16x128xbf16, #tpu.memory_space<vmem>>, vector<16x128xbf16>
    %c0_4 = arith.constant 0 : index
    %c0_5 = arith.constant 0 : index
    %5 = vector.load %arg4[%c0_4, %c0_5] : memref<128x256xbf16, #tpu.memory_space<vmem>>, vector<128x256xbf16>
    %cst = arith.constant dense<0.000000e+00> : vector<16x256xf32>
    %6 = tpu.matmul %4, %5, %cst {dimension_numbers = #tpu.dot_dimension_numbers<[1], [0], [0], [1], [0, 0, 1, 1], [], []>} : vector<16x128xbf16>, vector<128x256xbf16>, vector<16x256xf32> -> vector<16x256xf32>
    %7 = arith.addf %3, %6 : vector<16x256xf32>
    %c0_6 = arith.constant 0 : index
    %c0_7 = arith.constant 0 : index
    %8 = vector.load %arg7[%c0_6, %c0_7] : memref<16x256xf32, #tpu.memory_space<vmem>>, vector<16x256xf32>
    tpu.vector_store %arg7[%c0_6, %c0_7], %7 {strides = array<i32>} : memref<16x256xf32, #tpu.memory_space<vmem>>, vector<16x256xf32>,
    %c0_i32_8 = arith.constant 0 : i32
    %9 = arith.cmpi eq, %arg2, %c0_i32_8 : i32
    %10 = arith.extui %9 : i1 to i32
    %c0_i32_9 = arith.constant 0 : i32
    %11 = arith.cmpi ne, %10, %c0_i32_9 : i32
    scf.if %11 {
      %c0_10 = arith.constant 0 : index
      %c0_11 = arith.constant 0 : index
      %12 = vector.load %arg7[%c0_10, %c0_11] : memref<16x256xf32, #tpu.memory_space<vmem>>, vector<16x256xf32>
      %c0_12 = arith.constant 0 : index
      %c0_13 = arith.constant 0 : index
      %13 = vector.load %arg5[%c0_12, %c0_13] : memref<1x256xf32, #tpu.memory_space<vmem>>, vector<1x256xf32>
      %14 = vector.broadcast %13 : vector<1x256xf32> to vector<16x256xf32>
      %15 = arith.addf %12, %14 : vector<16x256xf32>
      %16 = math.absf %15 : vector<16x256xf32>
      %cst_14 = arith.constant 1.000000e+00 : f32
      %17 = vector.broadcast %cst_14 : f32 to vector<16x256xf32>
      %18 = arith.addf %17, %16 : vector<16x256xf32>
      %19 = arith.divf %15, %18 : vector<16x256xf32>
      %c0_15 = arith.constant 0 : index
      %c0_16 = arith.constant 0 : index
      %20 = vector.load %arg6[%c0_15, %c0_16] : memref<16x256xf32, #tpu.memory_space<vmem>>, vector<16x256xf32>
      tpu.vector_store %arg6[%c0_15, %c0_16], %19 {strides = array<i32>} : memref<16x256xf32, #tpu.memory_space<vmem>>, vector<16x256xf32>,
    } else {
    }
    return
  }
  func.func @transform_0(%arg0: i32, %arg1: i32, %arg2: i32) -> (i32, i32) {
    %c0_i32 = arith.constant 0 : i32
    return %arg0, %arg2 : i32, i32
  }
  func.func @transform_1(%arg0: i32, %arg1: i32, %arg2: i32) -> (i32, i32) {
    %c0_i32 = arith.constant 0 : i32
    return %arg2, %arg1 : i32, i32
  }
  func.func @transform_2(%arg0: i32, %arg1: i32, %arg2: i32) -> (i32, i32) {
    %c0_i32 = arith.constant 0 : i32
    %c0_i32_0 = arith.constant 0 : i32
    return %c0_i32, %arg1 : i32, i32
  }
  func.func @transform_3(%arg0: i32, %arg1: i32, %arg2: i32) -> (i32, i32) {
    %c0_i32 = arith.constant 0 : i32
    return %arg0, %arg1 : i32, i32
  }
}

</mosaic_0001>

<llo_original>
// kernel: forward.2
$region0: #{forward.2}
  #allocation0 [shape = 'u32[]', space=smem, size = 0x4, offset = 0x4, fixed_abs, tag = 'smem constant byte address 0x4 - core index']
  #allocation1 [shape = 'u32[72,128]{1,0:T(1,128)}', space=vmem, size = 0x9000, scoped, tag = 'internal scratch']
  #allocation2 [shape = 'f32[16,128]{1,0:T(8,128)}', space=vmem, size = 0x2000, scoped, tag = 'scratch operand']
  %s0 = inlined_call_operand.vmem [shape: bf16[16,256], index: 0, kind: input, shape index: {}]
  %s1 = inlined_call_operand.hbm [shape: bf16[256,128], index: 1, kind: input, shape index: {}]
  %s2 = inlined_call_operand.vmem [shape: f32[1,128], index: 2, kind: input, shape index: {}]
  %s3 = inlined_call_operand.vmem [shape: bf16[16,128], index: 3, kind: output, shape index: {}]
  %s4 = sld [smem:[#allocation0]]
  $region34: #{forward.2} parent=0
    _
  %s6 = ssub.s32 1, %s4
  %s7 = scalar_select 0, %s6, %s4
  $region1: #{forward.2} parent=0
    #allocation3 [shape = 'u8[65536]{0}', space=vmem, size = 0x10000, scoped, tag = 'input window, operand 1, single buffered']
    #allocation4 [shape = 's32[1]{0}', space=sflag, size = 0x4, scoped, tag = 'scoped memory for forward.2']
    %8 = vsyncpa [#allocation4], 0
    // Predicated region
    $region2: #{forward.2} parent=1 // pred_check
      _
    $region3: #{forward.2} parent=1 // pred_check_branch
      %10 = sbr.rel (0) target = $region5
    $region4: #{forward.2} parent=1 // pred_region
      _
    $region5: #{forward.2} parent=1 // pred_fallthru
      _
    // Predicated region
    $region6: #{forward.2} parent=1 // pred_check
      _
    $region7: #{forward.2} parent=1 // pred_check_branch
      %12 = sbr.rel (0) target = $region9
    $region8: #{forward.2} parent=1 // pred_region
      %14 = vsyncadd [#allocation4], 0
      %s15 = sshll.u32 %s1, 4
      %s16 = int_to_ptr.hbm [resolvable:$true] %s15
      %s17 = sshll.u32 [#allocation3], 4
      %s18 = int_to_ptr.vmem [resolvable:$true] %s17
      %23 = dma.hbm_to_vmem [thread:$0]  %s16, 2048, %s18, [#allocation4], 64, 64, 4
    $region9: #{forward.2} parent=1 // pred_fallthru
      _
    // Predicated region
    $region10: #{forward.2} parent=1 // pred_check
      _
    $region11: #{forward.2} parent=1 // pred_check_branch
      %25 = sbr.rel (0) target = $region13
    $region12: #{forward.2} parent=1 // pred_region
      _
    $region13: #{forward.2} parent=1 // pred_fallthru
      _
    // Predicated region
    $region14: #{forward.2} parent=1 // pred_check
      _
    $region15: #{forward.2} parent=1 // pred_check_branch
      %27 = sbr.rel (0) target = $region17
    $region16: #{forward.2} parent=1 // pred_region
      %29 = dma.done [#allocation4], 2048
    $region17: #{forward.2} parent=1 // pred_fallthru
      _
    %p30 = scmp.eq.s32.totalorder 0, 0
    // Predicated region
    $region18: #{forward.2} parent=1 // pred_check
      %p31 = pneg %p30
    $region19: #{forward.2} parent=1 // pred_check_branch
      %33 = sbr.rel (%p31) target = $region21
    $region20: #{forward.2} parent=1 // pred_region
      %34 = vst [vmem:[#allocation2] sm:$0xff] 0.0
      %35 = vst [vmem:[#allocation2 + $0x8] sm:$0xff] 0.0
    $region21: #{forward.2} parent=1 // pred_fallthru
      _
    %v36 = vld [vmem:[#allocation2] sm:$0xff]
    %v37 = vld [vmem:[#allocation2 + $0x8] sm:$0xff]
    %v38 = vld [vmem:[%s0] sm:$0xff]
    %v39 = vld [vmem:[%s0 + $0x8] sm:$0xff]
    %v40 = vld [vmem:[#allocation3] sm:$0xf]
    %v41 = vld [vmem:[#allocation3 + $0x4] sm:$0xf]
    %v42 = vld [vmem:[#allocation3 + $0x8] sm:$0xf]
    %v43 = vld [vmem:[#allocation3 + $0xc] sm:$0xf]
    %v44 = vld [vmem:[#allocation3 + $0x10] sm:$0xf]
    %v45 = vld [vmem:[#allocation3 + $0x14] sm:$0xf]
    %v46 = vld [vmem:[#allocation3 + $0x18] sm:$0xf]
    %v47 = vld [vmem:[#allocation3 + $0x1c] sm:$0xf]
    %v48 = vld [vmem:[#allocation3 + $0x20] sm:$0xf]
    %v49 = vld [vmem:[#allocation3 + $0x24] sm:$0xf]
    %v50 = vld [vmem:[#allocation3 + $0x28] sm:$0xf]
    %v51 = vld [vmem:[#allocation3 + $0x2c] sm:$0xf]
    %v52 = vld [vmem:[#allocation3 + $0x30] sm:$0xf]
    %v53 = vld [vmem:[#allocation3 + $0x34] sm:$0xf]
    %v54 = vld [vmem:[#allocation3 + $0x38] sm:$0xf]
    %v55 = vld [vmem:[#allocation3 + $0x3c] sm:$0xf]
    %v56 = vld [vmem:[#allocation3 + $0x40] sm:$0xf]
    %v57 = vld [vmem:[#allocation3 + $0x44] sm:$0xf]
    %v58 = vld [vmem:[#allocation3 + $0x48] sm:$0xf]
    %v59 = vld [vmem:[#allocation3 + $0x4c] sm:$0xf]
    %v60 = vld [vmem:[#allocation3 + $0x50] sm:$0xf]
    %v61 = vld [vmem:[#allocation3 + $0x54] sm:$0xf]
    %v62 = vld [vmem:[#allocation3 + $0x58] sm:$0xf]
    %v63 = vld [vmem:[#allocation3 + $0x5c] sm:$0xf]
    %v64 = vld [vmem:[#allocation3 + $0x60] sm:$0xf]
    %v65 = vld [vmem:[#allocation3 + $0x64] sm:$0xf]
    %v66 = vld [vmem:[#allocation3 + $0x68] sm:$0xf]
    %v67 = vld [vmem:[#allocation3 + $0x6c] sm:$0xf]
    %v68 = vld [vmem:[#allocation3 + $0x70] sm:$0xf]
    %v69 = vld [vmem:[#allocation3 + $0x74] sm:$0xf]
    %v70 = vld [vmem:[#allocation3 + $0x78] sm:$0xf]
    %v71 = vld [vmem:[#allocation3 + $0x7c] sm:$0xf]
    %v74 = vunpack.c.l.b16 %v38
    %v75 = vunpack.c.h.b16 %v38
    %v76 = vunpack.c.l.b16 %v39
    %v77 = vunpack.c.h.b16 %v39
    %v78 = vpack.c.b16 %v76, %v74
    %v79 = vpack.c.b16 %v77, %v75
    %v114 = vunpack.c.l.b16 %v40
    %v115 = vunpack.c.l.b16 %v41
    %v116 = vunpack.c.l.b16 %v42
    %v117 = vunpack.c.l.b16 %v43
    %v118 = vunpack.c.l.b16 %v44
    %v119 = vunpack.c.l.b16 %v45
    %v120 = vunpack.c.l.b16 %v46
    %v121 = vunpack.c.l.b16 %v47
    %v122 = vunpack.c.l.b16 %v48
    %v123 = vunpack.c.l.b16 %v49
    %v124 = vunpack.c.l.b16 %v50
    %v125 = vunpack.c.l.b16 %v51
    %v126 = vunpack.c.l.b16 %v52
    %v127 = vunpack.c.l.b16 %v53
    %v128 = vunpack.c.l.b16 %v54
    %v129 = vunpack.c.l.b16 %v55
    %v130 = vunpack.c.l.b16 %v56
    %v131 = vunpack.c.l.b16 %v57
    %v132 = vunpack.c.l.b16 %v58
    %v133 = vunpack.c.l.b16 %v59
    %v134 = vunpack.c.l.b16 %v60
    %v135 = vunpack.c.l.b16 %v61
    %v136 = vunpack.c.l.b16 %v62
    %v137 = vunpack.c.l.b16 %v63
    %v138 = vunpack.c.l.b16 %v64
    %v139 = vunpack.c.l.b16 %v65
    %v140 = vunpack.c.l.b16 %v66
    %v141 = vunpack.c.l.b16 %v67
    %v142 = vunpack.c.l.b16 %v68
    %v143 = vunpack.c.l.b16 %v69
    %v144 = vunpack.c.l.b16 %v70
    %v145 = vunpack.c.l.b16 %v71
    %v146 = vpack.c.b16 %v115, %v114
    %v147 = vpack.c.b16 %v117, %v116
    %v148 = vpack.c.b16 %v119, %v118
    %v149 = vpack.c.b16 %v121, %v120
    %v150 = vpack.c.b16 %v123, %v122
    %v151 = vpack.c.b16 %v125, %v124
    %v152 = vpack.c.b16 %v127, %v126
    %v153 = vpack.c.b16 %v129, %v128
    %v154 = vpack.c.b16 %v131, %v130
    %v155 = vpack.c.b16 %v133, %v132
    %v156 = vpack.c.b16 %v135, %v134
    %v157 = vpack.c.b16 %v137, %v136
    %v158 = vpack.c.b16 %v139, %v138
    %v159 = vpack.c.b16 %v141, %v140
    %v160 = vpack.c.b16 %v143, %v142
    %v161 = vpack.c.b16 %v145, %v144
    %178 = vmatpush.bf16.msra.mxu0 %v153
    %179 = vmatpush.bf16.msra.mxu0 %v152
    %180 = vmatpush.bf16.msra.mxu0 %v151
    %181 = vmatpush.bf16.msra.mxu0 %v150
    %182 = vmatpush.bf16.msra.mxu0 %v149
    %183 = vmatpush.bf16.msra.mxu0 %v148
    %184 = vmatpush.bf16.msra.mxu0 %v147
    %185 = vmatpush.bf16.msra.mxu0 %v146
    %186 = vmatmul.bf16.gmra.mxu0 %v78
    %v187 = vpop.f32.mrf.mxu0
    %v188 = vadd.f32 0.0, %v187
    %v189 = vpop.f32.mrf.mxu0
    %v190 = vadd.f32 0.0, %v189
    %191 = vdwg.mxu0
    %192 = vmatpush.bf16.msra.mxu0 %v161
    %193 = vmatpush.bf16.msra.mxu0 %v160
    %194 = vmatpush.bf16.msra.mxu0 %v159
    %195 = vmatpush.bf16.msra.mxu0 %v158
    %196 = vmatpush.bf16.msra.mxu0 %v157
    %197 = vmatpush.bf16.msra.mxu0 %v156
    %198 = vmatpush.bf16.msra.mxu0 %v155
    %199 = vmatpush.bf16.msra.mxu0 %v154
    %200 = vmatmul.bf16.gmra.mxu0 %v79
    %v201 = vpop.f32.mrf.mxu0
    %v202 = vadd.f32 %v188, %v201
    %v203 = vpop.f32.mrf.mxu0
    %v204 = vadd.f32 %v190, %v203
    %205 = vdwg.mxu0
    %v206 = vadd.f32 %v36, %v202
    %v207 = vadd.f32 %v37, %v204
    %208 = vst [vmem:[#allocation2] sm:$0xff] %v206
    %209 = vst [vmem:[#allocation2 + $0x8] sm:$0xff] %v207
    // Predicated region
    $region22: #{forward.2} parent=1 // pred_check
      %p210 = pneg %p30
    $region23: #{forward.2} parent=1 // pred_check_branch
      %212 = sbr.rel (%p210) target = $region25
    $region24: #{forward.2} parent=1 // pred_region
      %v213 = vld [vmem:[#allocation2] sm:$0xff]
      %v214 = vld [vmem:[#allocation2 + $0x8] sm:$0xff]
      %v215 = vld [vmem:[%s2] sm:$0x1]
      %v217 = vperm.slane %v215, 0
      %v219 = vadd.f32 %v213, %v217
      %v220 = vadd.f32 %v214, %v217
      %v221 = vand.u32 2147483647, %v219
      %v222 = vand.u32 2147483647, %v220
      %v223 = vadd.f32 %v221, 1.0
      %v224 = vadd.f32 %v222, 1.0
      %v225 = vrcp.pop %v223
      %v226 = vmul.f32 %v223, %v225
      %v227 = vsub.f32 1.0, %v226
      %v228 = vmul.f32 %v225, %v227
      %v229 = vadd.f32 %v225, %v228
      %vm230 = vweird.f32 %v223
      %vm231 = vweird.f32 %v225
      %vm232 = vmor %vm230, %vm231
      %v233 = vsel %vm232, %v225, %v229
      %v234 = vand.u32 2147483647, %v223
      %vm235 = vcmp.eq.f32.partialorder %v234, 8.507059e+37
      %v236 = vand.u32 %v223, 2147483648
      %v237 = vor.u32 1.1754944e-38, %v236
      %v238 = vsel %vm235, %v237, %v233
      %v239 = vmul.f32 %v219, %v238
      %v240 = vrcp.pop %v224
      %v241 = vmul.f32 %v224, %v240
      %v242 = vsub.f32 1.0, %v241
      %v243 = vmul.f32 %v240, %v242
      %v244 = vadd.f32 %v240, %v243
      %vm245 = vweird.f32 %v224
      %vm246 = vweird.f32 %v240
      %vm247 = vmor %vm245, %vm246
      %v248 = vsel %vm247, %v240, %v244
      %v249 = vand.u32 2147483647, %v224
      %vm250 = vcmp.eq.f32.partialorder %v249, 8.507059e+37
      %v251 = vand.u32 %v224, 2147483648
      %v252 = vor.u32 1.1754944e-38, %v251
      %v253 = vsel %vm250, %v252, %v248
      %v254 = vmul.f32 %v220, %v253
      %v255 = vpack.c.bf16 %v239, %v239
      %v256 = vpack.c.bf16 %v254, %v254
      %257 = vst [vmem:[%s3] sm:$0xf] %v255
      %258 = vst [vmem:[%s3 + $0x4] sm:$0xf] %v256
    $region25: #{forward.2} parent=1 // pred_fallthru
      _
    // Predicated region
    $region26: #{forward.2} parent=1 // pred_check
      _
    $region27: #{forward.2} parent=1 // pred_check_branch
      %260 = sbr.rel (0) target = $region29
    $region28: #{forward.2} parent=1 // pred_region
      _
    $region29: #{forward.2} parent=1 // pred_fallthru
      _
    // Predicated region
    $region30: #{forward.2} parent=1 // pred_check
      _
    $region31: #{forward.2} parent=1 // pred_check_branch
      %262 = sbr.rel (0) target = $region33
    $region32: #{forward.2} parent=1 // pred_region
      _
    $region33: #{forward.2} parent=1 // pred_fallthru
      _
    %263 = vsyncpa [#allocation4], 1

// kernel: forward.3
$region0: #{forward.3}
  #allocation0 [shape = 'u32[]', space=smem, size = 0x4, offset = 0x4, fixed_abs, tag = 'smem constant byte address 0x4 - core index']
  #allocation1 [shape = 'u32[72,128]{1,0:T(1,128)}', space=vmem, size = 0x9000, scoped, tag = 'internal scratch']
  #allocation2 [shape = 'f32[16,256]{1,0:T(8,128)}', space=vmem, size = 0x4000, scoped, tag = 'scratch operand']
  %s0 = inlined_call_operand.vmem [shape: bf16[16,128], index: 0, kind: input, shape index: {}]
  %s1 = inlined_call_operand.hbm [shape: bf16[128,256], index: 1, kind: input, shape index: {}]
  %s2 = inlined_call_operand.vmem [shape: f32[1,256], index: 2, kind: input, shape index: {}]
  %s3 = inlined_call_operand.vmem [shape: f32[16,256], index: 3, kind: output, shape index: {}]
  %s4 = sld [smem:[#allocation0]]
  $region34: #{forward.3} parent=0
    _
  %s6 = ssub.s32 1, %s4
  %s7 = scalar_select 0, %s6, %s4
  $region1: #{forward.3} parent=0
    #allocation3 [shape = 'u8[65536]{0}', space=vmem, size = 0x10000, scoped, tag = 'input window, operand 1, single buffered']
    #allocation4 [shape = 's32[1]{0}', space=sflag, size = 0x4, scoped, tag = 'scoped memory for forward.3']
    %8 = vsyncpa [#allocation4], 0
    // Predicated region
    $region2: #{forward.3} parent=1 // pred_check
      _
    $region3: #{forward.3} parent=1 // pred_check_branch
      %10 = sbr.rel (0) target = $region5
    $region4: #{forward.3} parent=1 // pred_region
      _
    $region5: #{forward.3} parent=1 // pred_fallthru
      _
    // Predicated region
    $region6: #{forward.3} parent=1 // pred_check
      _
    $region7: #{forward.3} parent=1 // pred_check_branch
      %12 = sbr.rel (0) target = $region9
    $region8: #{forward.3} parent=1 // pred_region
      %14 = vsyncadd [#allocation4], 0
      %s15 = sshll.u32 %s1, 4
      %s16 = int_to_ptr.hbm [resolvable:$true] %s15
      %s17 = sshll.u32 [#allocation3], 4
      %s18 = int_to_ptr.vmem [resolvable:$true] %s17
      %23 = dma.hbm_to_vmem [thread:$0]  %s16, 2048, %s18, [#allocation4], 128, 128, 8
    $region9: #{forward.3} parent=1 // pred_fallthru
      _
    // Predicated region
    $region10: #{forward.3} parent=1 // pred_check
      _
    $region11: #{forward.3} parent=1 // pred_check_branch
      %25 = sbr.rel (0) target = $region13
    $region12: #{forward.3} parent=1 // pred_region
      _
    $region13: #{forward.3} parent=1 // pred_fallthru
      _
    // Predicated region
    $region14: #{forward.3} parent=1 // pred_check
      _
    $region15: #{forward.3} parent=1 // pred_check_branch
      %27 = sbr.rel (0) target = $region17
    $region16: #{forward.3} parent=1 // pred_region
      %29 = dma.done [#allocation4], 2048
    $region17: #{forward.3} parent=1 // pred_fallthru
      _
    %p30 = scmp.eq.s32.totalorder 0, 0
    // Predicated region
    $region18: #{forward.3} parent=1 // pred_check
      %p31 = pneg %p30
    $region19: #{forward.3} parent=1 // pred_check_branch
      %33 = sbr.rel (%p31) target = $region21
    $region20: #{forward.3} parent=1 // pred_region
      %34 = vst [vmem:[#allocation2] sm:$0xff] 0.0
      %35 = vst [vmem:[#allocation2 + $0x8] sm:$0xff] 0.0
      %36 = vst [vmem:[#allocation2 + $0x10] sm:$0xff] 0.0
      %37 = vst [vmem:[#allocation2 + $0x18] sm:$0xff] 0.0
    $region21: #{forward.3} parent=1 // pred_fallthru
      _
    %v38 = vld [vmem:[#allocation2] sm:$0xff]
    %v39 = vld [vmem:[#allocation2 + $0x8] sm:$0xff]
    %v40 = vld [vmem:[#allocation2 + $0x10] sm:$0xff]
    %v41 = vld [vmem:[#allocation2 + $0x18] sm:$0xff]
    %v42 = vld [vmem:[%s0] sm:$0xf]
    %v43 = vld [vmem:[%s0 + $0x4] sm:$0xf]
    %v44 = vld [vmem:[#allocation3] sm:$0xff]
    %v45 = vld [vmem:[#allocation3 + $0x8] sm:$0xff]
    %v46 = vld [vmem:[#allocation3 + $0x10] sm:$0xff]
    %v47 = vld [vmem:[#allocation3 + $0x18] sm:$0xff]
    %v48 = vld [vmem:[#allocation3 + $0x20] sm:$0xff]
    %v49 = vld [vmem:[#allocation3 + $0x28] sm:$0xff]
    %v50 = vld [vmem:[#allocation3 + $0x30] sm:$0xff]
    %v51 = vld [vmem:[#allocation3 + $0x38] sm:$0xff]
    %v52 = vld [vmem:[#allocation3 + $0x40] sm:$0xff]
    %v53 = vld [vmem:[#allocation3 + $0x48] sm:$0xff]
    %v54 = vld [vmem:[#allocation3 + $0x50] sm:$0xff]
    %v55 = vld [vmem:[#allocation3 + $0x58] sm:$0xff]
    %v56 = vld [vmem:[#allocation3 + $0x60] sm:$0xff]
    %v57 = vld [vmem:[#allocation3 + $0x68] sm:$0xff]
    %v58 = vld [vmem:[#allocation3 + $0x70] sm:$0xff]
    %v59 = vld [vmem:[#allocation3 + $0x78] sm:$0xff]
    %v62 = vunpack.c.l.b16 %v42
    %v63 = vunpack.c.l.b16 %v43
    %v64 = vpack.c.b16 %v63, %v62
    %v82 = vunpack.c.l.b16 %v44
    %v83 = vunpack.c.h.b16 %v44
    %v84 = vunpack.c.l.b16 %v45
    %v85 = vunpack.c.h.b16 %v45
    %v86 = vunpack.c.l.b16 %v46
    %v87 = vunpack.c.h.b16 %v46
    %v88 = vunpack.c.l.b16 %v47
    %v89 = vunpack.c.h.b16 %v47
    %v90 = vunpack.c.l.b16 %v48
    %v91 = vunpack.c.h.b16 %v48
    %v92 = vunpack.c.l.b16 %v49
    %v93 = vunpack.c.h.b16 %v49
    %v94 = vunpack.c.l.b16 %v50
    %v95 = vunpack.c.h.b16 %v50
    %v96 = vunpack.c.l.b16 %v51
    %v97 = vunpack.c.h.b16 %v51
    %v98 = vunpack.c.l.b16 %v52
    %v99 = vunpack.c.h.b16 %v52
    %v100 = vunpack.c.l.b16 %v53
    %v101 = vunpack.c.h.b16 %v53
    %v102 = vunpack.c.l.b16 %v54
    %v103 = vunpack.c.h.b16 %v54
    %v104 = vunpack.c.l.b16 %v55
    %v105 = vunpack.c.h.b16 %v55
    %v106 = vunpack.c.l.b16 %v56
    %v107 = vunpack.c.h.b16 %v56
    %v108 = vunpack.c.l.b16 %v57
    %v109 = vunpack.c.h.b16 %v57
    %v110 = vunpack.c.l.b16 %v58
    %v111 = vunpack.c.h.b16 %v58
    %v112 = vunpack.c.l.b16 %v59
    %v113 = vunpack.c.h.b16 %v59
    %v114 = vpack.c.b16 %v84, %v82
    %v115 = vpack.c.b16 %v85, %v83
    %v116 = vpack.c.b16 %v88, %v86
    %v117 = vpack.c.b16 %v89, %v87
    %v118 = vpack.c.b16 %v92, %v90
    %v119 = vpack.c.b16 %v93, %v91
    %v120 = vpack.c.b16 %v96, %v94
    %v121 = vpack.c.b16 %v97, %v95
    %v122 = vpack.c.b16 %v100, %v98
    %v123 = vpack.c.b16 %v101, %v99
    %v124 = vpack.c.b16 %v104, %v102
    %v125 = vpack.c.b16 %v105, %v103
    %v126 = vpack.c.b16 %v108, %v106
    %v127 = vpack.c.b16 %v109, %v107
    %v128 = vpack.c.b16 %v112, %v110
    %v129 = vpack.c.b16 %v113, %v111
    %146 = vmatpush.bf16.msra.mxu0 %v128
    %147 = vmatpush.bf16.msra.mxu0 %v126
    %148 = vmatpush.bf16.msra.mxu0 %v124
    %149 = vmatpush.bf16.msra.mxu0 %v122
    %150 = vmatpush.bf16.msra.mxu0 %v120
    %151 = vmatpush.bf16.msra.mxu0 %v118
    %152 = vmatpush.bf16.msra.mxu0 %v116
    %153 = vmatpush.bf16.msra.mxu0 %v114
    %154 = vmatmul.bf16.gmra.mxu0 %v64
    %v155 = vpop.f32.mrf.mxu0
    %v156 = vadd.f32 0.0, %v155
    %v157 = vpop.f32.mrf.mxu0
    %v158 = vadd.f32 0.0, %v157
    %159 = vdwg.mxu0
    %160 = vmatpush.bf16.msra.mxu0 %v129
    %161 = vmatpush.bf16.msra.mxu0 %v127
    %162 = vmatpush.bf16.msra.mxu0 %v125
    %163 = vmatpush.bf16.msra.mxu0 %v123
    %164 = vmatpush.bf16.msra.mxu0 %v121
    %165 = vmatpush.bf16.msra.mxu0 %v119
    %166 = vmatpush.bf16.msra.mxu0 %v117
    %167 = vmatpush.bf16.msra.mxu0 %v115
    %168 = vmatmul.bf16.gmra.mxu0 %v64
    %v169 = vpop.f32.mrf.mxu0
    %v170 = vadd.f32 0.0, %v169
    %v171 = vpop.f32.mrf.mxu0
    %v172 = vadd.f32 0.0, %v171
    %173 = vdwg.mxu0
    %v174 = vadd.f32 %v38, %v156
    %v175 = vadd.f32 %v39, %v170
    %v176 = vadd.f32 %v40, %v158
    %v177 = vadd.f32 %v41, %v172
    %178 = vst [vmem:[#allocation2] sm:$0xff] %v174
    %179 = vst [vmem:[#allocation2 + $0x8] sm:$0xff] %v175
    %180 = vst [vmem:[#allocation2 + $0x10] sm:$0xff] %v176
    %181 = vst [vmem:[#allocation2 + $0x18] sm:$0xff] %v177
    // Predicated region
    $region22: #{forward.3} parent=1 // pred_check
      %p182 = pneg %p30
    $region23: #{forward.3} parent=1 // pred_check_branch
      %184 = sbr.rel (%p182) target = $region25
    $region24: #{forward.3} parent=1 // pred_region
      %v185 = vld [vmem:[#allocation2] sm:$0xff]
      %v186 = vld [vmem:[#allocation2 + $0x8] sm:$0xff]
      %v187 = vld [vmem:[#allocation2 + $0x10] sm:$0xff]
      %v188 = vld [vmem:[#allocation2 + $0x18] sm:$0xff]
      %v189 = vld [vmem:[%s2] sm:$0x3]
      %v191 = vperm.slane %v189, 0
      %v192 = vperm.slane %v189, 1
      %v195 = vadd.f32 %v185, %v191
      %v196 = vadd.f32 %v186, %v192
      %v197 = vadd.f32 %v187, %v191
      %v198 = vadd.f32 %v188, %v192
      %v199 = vand.u32 2147483647, %v195
      %v200 = vand.u32 2147483647, %v196
      %v201 = vand.u32 2147483647, %v197
      %v202 = vand.u32 2147483647, %v198
      %v203 = vadd.f32 %v199, 1.0
      %v204 = vadd.f32 %v200, 1.0
      %v205 = vadd.f32 %v201, 1.0
      %v206 = vadd.f32 %v202, 1.0
      %v207 = vrcp.pop %v203
      %v208 = vmul.f32 %v203, %v207
      %v209 = vsub.f32 1.0, %v208
      %v210 = vmul.f32 %v207, %v209
      %v211 = vadd.f32 %v207, %v210
      %vm212 = vweird.f32 %v203
      %vm213 = vweird.f32 %v207
      %vm214 = vmor %vm212, %vm213
      %v215 = vsel %vm214, %v207, %v211
      %v216 = vand.u32 2147483647, %v203
      %vm217 = vcmp.eq.f32.partialorder %v216, 8.507059e+37
      %v218 = vand.u32 %v203, 2147483648
      %v219 = vor.u32 1.1754944e-38, %v218
      %v220 = vsel %vm217, %v219, %v215
      %v221 = vmul.f32 %v195, %v220
      %v222 = vrcp.pop %v204
      %v223 = vmul.f32 %v204, %v222
      %v224 = vsub.f32 1.0, %v223
      %v225 = vmul.f32 %v222, %v224
      %v226 = vadd.f32 %v222, %v225
      %vm227 = vweird.f32 %v204
      %vm228 = vweird.f32 %v222
      %vm229 = vmor %vm227, %vm228
      %v230 = vsel %vm229, %v222, %v226
      %v231 = vand.u32 2147483647, %v204
      %vm232 = vcmp.eq.f32.partialorder %v231, 8.507059e+37
      %v233 = vand.u32 %v204, 2147483648
      %v234 = vor.u32 1.1754944e-38, %v233
      %v235 = vsel %vm232, %v234, %v230
      %v236 = vmul.f32 %v196, %v235
      %v237 = vrcp.pop %v205
      %v238 = vmul.f32 %v205, %v237
      %v239 = vsub.f32 1.0, %v238
      %v240 = vmul.f32 %v237, %v239
      %v241 = vadd.f32 %v237, %v240
      %vm242 = vweird.f32 %v205
      %vm243 = vweird.f32 %v237
      %vm244 = vmor %vm242, %vm243
      %v245 = vsel %vm244, %v237, %v241
      %v246 = vand.u32 2147483647, %v205
      %vm247 = vcmp.eq.f32.partialorder %v246, 8.507059e+37
      %v248 = vand.u32 %v205, 2147483648
      %v249 = vor.u32 1.1754944e-38, %v248
      %v250 = vsel %vm247, %v249, %v245
      %v251 = vmul.f32 %v197, %v250
      %v252 = vrcp.pop %v206
      %v253 = vmul.f32 %v206, %v252
      %v254 = vsub.f32 1.0, %v253
      %v255 = vmul.f32 %v252, %v254
      %v256 = vadd.f32 %v252, %v255
      %vm257 = vweird.f32 %v206
      %vm258 = vweird.f32 %v252
      %vm259 = vmor %vm257, %vm258
      %v260 = vsel %vm259, %v252, %v256
      %v261 = vand.u32 2147483647, %v206
      %vm262 = vcmp.eq.f32.partialorder %v261, 8.507059e+37
      %v263 = vand.u32 %v206, 2147483648
      %v264 = vor.u32 1.1754944e-38, %v263
      %v265 = vsel %vm262, %v264, %v260
      %v266 = vmul.f32 %v198, %v265
      %267 = vst [vmem:[%s3] sm:$0xff] %v221
      %268 = vst [vmem:[%s3 + $0x8] sm:$0xff] %v236
      %269 = vst [vmem:[%s3 + $0x10] sm:$0xff] %v251
      %270 = vst [vmem:[%s3 + $0x18] sm:$0xff] %v266
    $region25: #{forward.3} parent=1 // pred_fallthru
      _
    // Predicated region
    $region26: #{forward.3} parent=1 // pred_check
      _
    $region27: #{forward.3} parent=1 // pred_check_branch
      %272 = sbr.rel (0) target = $region29
    $region28: #{forward.3} parent=1 // pred_region
      _
    $region29: #{forward.3} parent=1 // pred_fallthru
      _
    // Predicated region
    $region30: #{forward.3} parent=1 // pred_check
      _
    $region31: #{forward.3} parent=1 // pred_check_branch
      %274 = sbr.rel (0) target = $region33
    $region32: #{forward.3} parent=1 // pred_region
      _
    $region33: #{forward.3} parent=1 // pred_fallthru
      _
    %275 = vsyncpa [#allocation4], 1

</llo_original>
